<compile_context>
chip_gen: v6e
topology: v6e:2x2x1
jax: 0.10.0
libtpu: 0.0.40
codegen_flags: <defaults>
</compile_context>

<pallas_src>
import functools

import jax
import jax.numpy as jnp
from jax.experimental import pallas as pl
from jax.experimental.pallas import tpu as pltpu


# ----------------------------- Pallas kernel -------------------------------

def _quadpath_kernel(x_ref, wq_ref, bq_ref, wl_ref, bl_ref, o_ref):
    # x_ref : [1, Cin, TP]        pixels-on-lanes tile of the NCHW slab
    # wq_ref: [num_quad, Cin]     quadratic 1x1 conv weight (resident)
    # bq_ref: [num_quad, 1]
    # wl_ref: [out_dim, num_quad] quad_linear 1x1 conv weight (resident)
    # bl_ref: [out_dim, 1]
    # o_ref : [1, out_dim, TP]
    x = x_ref[0]                                           # [Cin, TP]
    y = jnp.dot(wq_ref[...], x,
                preferred_element_type=jnp.float32,
                precision=jax.lax.Precision.HIGHEST) + bq_ref[...]     # [Q, TP] f32
    y2 = y * y                                             # VPU, f32 (v5e-safe)
    out = jnp.dot(wl_ref[...], y2,
                  preferred_element_type=jnp.float32,
                  precision=jax.lax.Precision.HIGHEST) + bl_ref[...]   # [Co, TP] f32
    out = out + x.astype(jnp.float32)                      # skip (out_dim == in_dim)
    o_ref[0] = out.astype(o_ref.dtype)


def _round_up(a, b):
    return (a + b - 1) // b * b


@functools.partial(jax.jit, static_argnames=("tile_p",))
def quadpath_forward(x_nchw, wq, bq, wl, bl, *, tile_p=None):
    """QuadPath prep-stage forward.

    x_nchw: [B, in_dim, H, W]
    wq    : [num_quad, in_dim]   (1x1 conv weight, squeezed)
    bq    : [num_quad]
    wl    : [out_dim, num_quad]
    bl    : [out_dim]
    returns [B, out_dim, H, W]
    """
    B, Cin, H, W = x_nchw.shape
    num_quad, in_dim_w = wq.shape
    out_dim = wl.shape[0]
    assert in_dim_w == Cin, "quadratic weight in_dim mismatch"
    assert out_dim == Cin, "skip connection requires out_dim == in_dim"

    P = H * W
    # Large lane-dense pixel tiles; tile last dim must be a multiple of 128.
    if tile_p is None:
        tile_p = min(4096, _round_up(P, 128))
    else:
        tile_p = _round_up(int(tile_p), 128)
    P_pad = _round_up(P, tile_p)
    n_ptiles = P_pad // tile_p

    # Free reshape (no transpose): [B, Cin, H, W] -> [B, Cin, H*W]
    x3 = x_nchw.reshape(B, Cin, P)
    if P_pad != P:
        x3 = jnp.pad(x3, ((0, 0), (0, 0), (0, P_pad - P)))

    bq2 = bq.reshape(num_quad, 1)
    bl2 = bl.reshape(out_dim, 1)

    dtype_bytes = x3.dtype.itemsize
    cost = pl.CostEstimate(
        flops=2 * B * P_pad * (Cin * num_quad + num_quad * out_dim)
              + B * P_pad * (2 * num_quad + out_dim),        # square + biases + skip
        transcendentals=0,
        bytes_accessed=B * P_pad * (Cin + out_dim) * dtype_bytes
                       + (wq.size + bq.size + wl.size + bl.size) * 4,
    )

    out3 = pl.pallas_call(
        _quadpath_kernel,
        out_shape=jax.ShapeDtypeStruct((B, out_dim, P_pad), x3.dtype),
        grid_spec=pltpu.PrefetchScalarGridSpec(
            num_scalar_prefetch=0,
            grid=(B, n_ptiles),
            in_specs=[
                # streamed activation tile: pixels on lanes, channels on sublanes
                pl.BlockSpec((1, Cin, tile_p), lambda b, p: (b, 0, p)),
                # resident (grid-invariant) weights / biases
                pl.BlockSpec((num_quad, Cin), lambda b, p: (0, 0)),
                pl.BlockSpec((num_quad, 1), lambda b, p: (0, 0)),
                pl.BlockSpec((out_dim, num_quad), lambda b, p: (0, 0)),
                pl.BlockSpec((out_dim, 1), lambda b, p: (0, 0)),
            ],
            out_specs=pl.BlockSpec((1, out_dim, tile_p), lambda b, p: (b, 0, p)),
        ),
        compiler_params=pltpu.CompilerParams(
            dimension_semantics=("parallel", "parallel")),
        cost_estimate=cost,
    )(x3, wq, bq2, wl, bl2)

    # Drop pixel padding (no-op slice when P_pad == P) and restore [B, Co, H, W].
    out = out3[:, :, :P].reshape(B, out_dim, H, W)
    return out


# ------------------------- parameter construction --------------------------

def gram_schmidt_rows(v):
    """Row-wise Gram-Schmidt, mirroring QuadPath.gram_schmidt."""
    rows = []
    for i in range(v.shape[0]):
        vec = v[i, :]
        for r in rows:
            vec = vec - jnp.dot(r, vec) * r
        vec = vec / jnp.linalg.norm(vec)
        rows.append(vec)
    return jnp.stack(rows, axis=0)


def make_params(key, in_dim, out_dim, num_quad):
    k1, k2, k3, k4 = jax.random.split(key, 4)
    # quadratic conv: weight [num_quad, in_dim], orthonormalized rows
    wq_raw = jax.random.uniform(k1, (num_quad, in_dim), jnp.float32, -0.5, 0.5)
    wq = gram_schmidt_rows(wq_raw)
    bq_bound = 1.0 / jnp.sqrt(jnp.float32(in_dim))
    bq = jax.random.uniform(k2, (num_quad,), jnp.float32, -bq_bound, bq_bound)
    # quad_linear conv: weight [out_dim, num_quad], xavier uniform (gain=1)
    xav = jnp.sqrt(6.0 / (num_quad + out_dim))
    wl = jax.random.uniform(k3, (out_dim, num_quad), jnp.float32, -xav, xav)
    bl_bound = 1.0 / jnp.sqrt(jnp.float32(num_quad))
    bl = jax.random.uniform(k4, (out_dim,), jnp.float32, -bl_bound, bl_bound)
    return wq, bq, wl, bl


def quadpath_reference(x_nchw, wq, bq, wl, bl):
    """Plain-JAX reference of the prep-stage forward for validation."""
    hp = jax.lax.Precision.HIGHEST
    y = jnp.einsum("bchw,qc->bqhw", x_nchw, wq, precision=hp) + bq[None, :, None, None]
    y2 = y * y
    out = jnp.einsum("bqhw,oq->bohw", y2, wl, precision=hp) + bl[None, :, None, None]
    return out + x_nchw


# --------------------------------- main -------------------------------------

if __name__ == "__main__":
    B, in_dim, H, W = 2, 4, 16, 16
    out_dim = in_dim            # required by the skip connection
    num_quad = 8
    num_prod = 4                # only used in the (skipped) non-prep branch

    key = jax.random.PRNGKey(0)
    kx, kp = jax.random.split(key)
    x = jax.random.normal(kx, (B, in_dim, H, W), jnp.float32)
    wq, bq, wl, bl = make_params(kp, in_dim, out_dim, num_quad)

    out = quadpath_forward(x, wq, bq, wl, bl)
    out = jax.block_until_ready(out)

    ref = quadpath_reference(x, wq, bq, wl, bl)
    assert out.shape == (B, out_dim, H, W)
    assert jnp.allclose(out, ref, atol=1e-4, rtol=1e-4), "mismatch vs reference"

    # Also exercise the ragged-pixel path (forces padding + multiple tiles).
    out2 = quadpath_forward(x, wq, bq, wl, bl, tile_p=128)
    out2 = jax.block_until_ready(out2)
    assert jnp.allclose(out2, ref, atol=1e-4, rtol=1e-4), "mismatch (tiled path)"

    # TODO(synk): non-prep-stage branch (calc_quads + prod_linear) and the
    # weight-surgery methods (replace_previous / normalize / reorder) are
    # training-time host-side logic, not part of the hot forward path here.

    print("KERNEL_OK")
</pallas_src>

<mosaic_0001>
module attributes {stable_mosaic.version = 11 : i64} {
  func.func @_quadpath_kernel(%arg0: i32, %arg1: i32, %arg2: memref<1x4x256xf32, #tpu.memory_space<vmem>>, %arg3: memref<8x4xf32, #tpu.memory_space<vmem>>, %arg4: memref<8x1xf32, #tpu.memory_space<vmem>>, %arg5: memref<4x8xf32, #tpu.memory_space<vmem>>, %arg6: memref<4x1xf32, #tpu.memory_space<vmem>>, %arg7: memref<1x4x256xf32, #tpu.memory_space<vmem>>) attributes {dimension_semantics = [#tpu.dimension_semantics<parallel>, #tpu.dimension_semantics<parallel>], iteration_bounds = array<i64: 2, 1>, scalar_prefetch = 0 : i64, scratch_operands = 0 : i64, tpu.core_type = #tpu.core_type<tc>, window_params = [{transform_indices = @transform_0, window_bounds = array<i64: 1, 4, 256>}, {pipeline_mode = #tpu.pipeline_mode<synchronous>, transform_indices = @transform_1, window_bounds = array<i64: 8, 4>}, {pipeline_mode = #tpu.pipeline_mode<synchronous>, transform_indices = @transform_2, window_bounds = array<i64: 8, 1>}, {pipeline_mode = #tpu.pipeline_mode<synchronous>, transform_indices = @transform_3, window_bounds = array<i64: 4, 8>}, {pipeline_mode = #tpu.pipeline_mode<synchronous>, transform_indices = @transform_4, window_bounds = array<i64: 4, 1>}, {transform_indices = @transform_5, window_bounds = array<i64: 1, 4, 256>}]} {
    %c0 = arith.constant 0 : index
    %c0_0 = arith.constant 0 : index
    %c0_1 = arith.constant 0 : index
    %0 = vector.load %arg2[%c0, %c0_0, %c0_1] : memref<1x4x256xf32, #tpu.memory_space<vmem>>, vector<1x4x256xf32>
    %1 = vector.shape_cast %0 : vector<1x4x256xf32> to vector<4x256xf32>
    %c0_2 = arith.constant 0 : index
    %c0_3 = arith.constant 0 : index
    %2 = vector.load %arg3[%c0_2, %c0_3] : memref<8x4xf32, #tpu.memory_space<vmem>>, vector<8x4xf32>
    %cst = arith.constant dense<0.000000e+00> : vector<8x256xf32>
    %3 = tpu.matmul %2, %1, %cst {dimension_numbers = #tpu.dot_dimension_numbers<[1], [0], [0], [1], [0, 0, 1, 1], [], []>, precision = #tpu.contract_precision<fp32>} : vector<8x4xf32>, vector<4x256xf32>, vector<8x256xf32> -> vector<8x256xf32>
    %c0_4 = arith.constant 0 : index
    %c0_5 = arith.constant 0 : index
    %4 = vector.load %arg4[%c0_4, %c0_5] : memref<8x1xf32, #tpu.memory_space<vmem>>, vector<8x1xf32>
    %5 = vector.broadcast %4 : vector<8x1xf32> to vector<8x256xf32>
    %6 = arith.addf %3, %5 : vector<8x256xf32>
    %7 = arith.mulf %6, %6 : vector<8x256xf32>
    %c0_6 = arith.constant 0 : index
    %c0_7 = arith.constant 0 : index
    %8 = vector.load %arg5[%c0_6, %c0_7] : memref<4x8xf32, #tpu.memory_space<vmem>>, vector<4x8xf32>
    %cst_8 = arith.constant dense<0.000000e+00> : vector<4x256xf32>
    %9 = tpu.matmul %8, %7, %cst_8 {dimension_numbers = #tpu.dot_dimension_numbers<[1], [0], [0], [1], [0, 0, 1, 1], [], []>, precision = #tpu.contract_precision<fp32>} : vector<4x8xf32>, vector<8x256xf32>, vector<4x256xf32> -> vector<4x256xf32>
    %c0_9 = arith.constant 0 : index
    %c0_10 = arith.constant 0 : index
    %10 = vector.load %arg6[%c0_9, %c0_10] : memref<4x1xf32, #tpu.memory_space<vmem>>, vector<4x1xf32>
    %11 = vector.broadcast %10 : vector<4x1xf32> to vector<4x256xf32>
    %12 = arith.addf %9, %11 : vector<4x256xf32>
    %13 = arith.addf %12, %1 : vector<4x256xf32>
    %c0_11 = arith.constant 0 : index
    %c0_12 = arith.constant 0 : index
    %c0_13 = arith.constant 0 : index
    %14 = vector.load %arg7[%c0_11, %c0_12, %c0_13] : memref<1x4x256xf32, #tpu.memory_space<vmem>>, vector<1x4x256xf32>
    %15 = vector.shape_cast %14 : vector<1x4x256xf32> to vector<4x256xf32>
    %16 = vector.shape_cast %13 : vector<4x256xf32> to vector<1x4x256xf32>
    tpu.vector_store %arg7[%c0_11, %c0_12, %c0_13], %16 {strides = array<i32>} : memref<1x4x256xf32, #tpu.memory_space<vmem>>, vector<1x4x256xf32>,
    return
  }
  func.func @transform_0(%arg0: i32, %arg1: i32) -> (i32, i32, i32) {
    %c0_i32 = arith.constant 0 : i32
    %c0_i32_0 = arith.constant 0 : i32
    return %arg0, %c0_i32, %arg1 : i32, i32, i32
  }
  func.func @transform_1(%arg0: i32, %arg1: i32) -> (i32, i32) {
    %c0_i32 = arith.constant 0 : i32
    %c0_i32_0 = arith.constant 0 : i32
    %c0_i32_1 = arith.constant 0 : i32
    return %c0_i32, %c0_i32_0 : i32, i32
  }
  func.func @transform_2(%arg0: i32, %arg1: i32) -> (i32, i32) {
    %c0_i32 = arith.constant 0 : i32
    %c0_i32_0 = arith.constant 0 : i32
    %c0_i32_1 = arith.constant 0 : i32
    return %c0_i32, %c0_i32_0 : i32, i32
  }
  func.func @transform_3(%arg0: i32, %arg1: i32) -> (i32, i32) {
    %c0_i32 = arith.constant 0 : i32
    %c0_i32_0 = arith.constant 0 : i32
    %c0_i32_1 = arith.constant 0 : i32
    return %c0_i32, %c0_i32_0 : i32, i32
  }
  func.func @transform_4(%arg0: i32, %arg1: i32) -> (i32, i32) {
    %c0_i32 = arith.constant 0 : i32
    %c0_i32_0 = arith.constant 0 : i32
    %c0_i32_1 = arith.constant 0 : i32
    return %c0_i32, %c0_i32_0 : i32, i32
  }
  func.func @transform_5(%arg0: i32, %arg1: i32) -> (i32, i32, i32) {
    %c0_i32 = arith.constant 0 : i32
    %c0_i32_0 = arith.constant 0 : i32
    return %arg0, %c0_i32, %arg1 : i32, i32, i32
  }
}

</mosaic_0001>

<llo_original>
// kernel: quadpath_forward.1
$region0: #{quadpath_forward.1}
  #allocation0 [shape = 'u32[]', space=smem, size = 0x4, offset = 0x4, fixed_abs, tag = 'smem constant byte address 0x4 - core index']
  #allocation1 [shape = 'u32[144,128]{1,0:T(1,128)}', space=vmem, size = 0x12000, scoped, tag = 'internal scratch']
  %s0 = inlined_call_operand.vmem [shape: f32[2,4,256], index: 0, kind: input, shape index: {}]
  %s1 = inlined_call_operand.vmem [shape: f32[8,4], index: 1, kind: input, shape index: {}]
  %s2 = inlined_call_operand.vmem [shape: f32[8,1], index: 2, kind: input, shape index: {}]
  %s3 = inlined_call_operand.vmem [shape: f32[4,8], index: 3, kind: input, shape index: {}]
  %s4 = inlined_call_operand.vmem [shape: f32[4,1], index: 4, kind: input, shape index: {}]
  %s5 = inlined_call_operand.vmem [shape: f32[2,4,256], index: 5, kind: output, shape index: {}]
  %s6 = sld [smem:[#allocation0]]
  $region53: #{quadpath_forward.1} parent=0
    _
  %s8 = ssub.s32 1, %s6
  %s9 = scalar_select 0, %s8, %s6
  loop: start=0, step=1, limit=4
  $region2: #{quadpath_forward.1} parent=0 // loop_pre_header
    _
  $region3: #{quadpath_forward.1} parent=0 // loop_header
    %s11 = sphi 0, %s15
    %p12 = scmp.ge.s32.totalorder %s11, 4
    %s18 = sphi 0, %s30
    %s19 = sphi 0, %s26
    %s20 = sphi 0, %s18
    %s21 = sphi 0, %s19
    %s22 = sphi 0, %s20
    %s23 = sphi 0, %s21
    %s35 = sphi 0, %s37
    %s38 = sphi 0, %s35
    %s39 = sphi 0, %s38
    %s55 = sphi 0, %s39
    %s59 = sphi 0, %s59
    %s61 = sphi 0, %s59
    %s62 = sphi 0, %s61
    %s76 = sphi 0, %s62
    %s80 = sphi 0, %s80
    %s82 = sphi 0, %s80
    %s83 = sphi 0, %s82
    %s97 = sphi 0, %s83
    %s101 = sphi 0, %s101
    %s103 = sphi 0, %s101
    %s104 = sphi 0, %s103
    %s118 = sphi 0, %s104
    %s122 = sphi 0, %s122
    %s124 = sphi 0, %s122
    %s125 = sphi 0, %s124
    %s139 = sphi 0, %s125
    %s147 = sphi 0, %s149
    %s150 = sphi 0, %s147
    %s151 = sphi 0, %s150
    %s167 = sphi 0, %s151
  $region4: #{quadpath_forward.1} parent=0 // loop_header_branch
    %14 = sbr.rel (%p12) target = $region8
  $region5: #{quadpath_forward.1} parent=0 // loop_body
    %s16 = ssub.s32 %s11, 1
    %s17 = ssub.s32 %s11, 2
    %s24 = sadd.s32 1, %s19
    %p25 = scmp.ge.s32.totalorder %s24, 1
    %s26 = scalar_select %p25, 0, %s24
    %s27 = sadd.s32 1, %s18
    %s28 = scalar_select %p25, %s27, %s18
    %p29 = scmp.ge.s32.totalorder %s28, 2
    %s30 = scalar_select %p29, 0, %s28
    %s31 = ssub.s32 %s18, %s30
    %s32 = ssub.s32 %s19, %s26
    %s33 = sor.u32 %s31, %s32
    %p34 = scmp.eq.s32.totalorder %s33, 0
    %s36 = sadd.s32 %s35, 1
    %s37 = scalar_select %p34, %s35, %s36
    %p40 = pneg %p34
    %p41 = scmp.eq.s32.totalorder %s11, 1
    %p42 = por %p40, %p41
    %p43 = scmp.ne.s32.totalorder %s35, %s38
    %p44 = scmp.eq.s32.totalorder %s11, 0
    %p45 = por %p43, %p44
    %p46 = scmp.ne.s32.totalorder %s35, %s38
    %p47 = scmp.eq.s32.totalorder %s16, 1
    %p48 = por %p46, %p47
    %p49 = scmp.ne.s32.totalorder %s38, %s39
    %p50 = scmp.eq.s32.totalorder %s16, 0
    %p51 = por %p49, %p50
    %p52 = scmp.ne.s32.totalorder %s38, %s39
    %p53 = scmp.eq.s32.totalorder %s17, 1
    %p54 = por %p52, %p53
    %p56 = scmp.ne.s32.totalorder %s39, %s55
    %p57 = scmp.eq.s32.totalorder %s17, 0
    %p58 = por %p56, %p57
    %s60 = sadd.s32 %s59, 1
    %p63 = scmp.eq.s32.totalorder %s11, 1
    %p64 = scmp.ne.s32.totalorder %s59, %s61
    %p65 = scmp.eq.s32.totalorder %s11, 0
    %p66 = por %p64, %p65
    %p67 = scmp.ne.s32.totalorder %s59, %s61
    %p68 = scmp.eq.s32.totalorder %s16, 1
    %p69 = por %p67, %p68
    %p70 = scmp.ne.s32.totalorder %s61, %s62
    %p71 = scmp.eq.s32.totalorder %s16, 0
    %p72 = por %p70, %p71
    %p73 = scmp.ne.s32.totalorder %s61, %s62
    %p74 = scmp.eq.s32.totalorder %s17, 1
    %p75 = por %p73, %p74
    %p77 = scmp.ne.s32.totalorder %s62, %s76
    %p78 = scmp.eq.s32.totalorder %s17, 0
    %p79 = por %p77, %p78
    %s81 = sadd.s32 %s80, 1
    %p84 = scmp.eq.s32.totalorder %s11, 1
    %p85 = scmp.ne.s32.totalorder %s80, %s82
    %p86 = scmp.eq.s32.totalorder %s11, 0
    %p87 = por %p85, %p86
    %p88 = scmp.ne.s32.totalorder %s80, %s82
    %p89 = scmp.eq.s32.totalorder %s16, 1
    %p90 = por %p88, %p89
    %p91 = scmp.ne.s32.totalorder %s82, %s83
    %p92 = scmp.eq.s32.totalorder %s16, 0
    %p93 = por %p91, %p92
    %p94 = scmp.ne.s32.totalorder %s82, %s83
    %p95 = scmp.eq.s32.totalorder %s17, 1
    %p96 = por %p94, %p95
    %p98 = scmp.ne.s32.totalorder %s83, %s97
    %p99 = scmp.eq.s32.totalorder %s17, 0
    %p100 = por %p98, %p99
    %s102 = sadd.s32 %s101, 1
    %p105 = scmp.eq.s32.totalorder %s11, 1
    %p106 = scmp.ne.s32.totalorder %s101, %s103
    %p107 = scmp.eq.s32.totalorder %s11, 0
    %p108 = por %p106, %p107
    %p109 = scmp.ne.s32.totalorder %s101, %s103
    %p110 = scmp.eq.s32.totalorder %s16, 1
    %p111 = por %p109, %p110
    %p112 = scmp.ne.s32.totalorder %s103, %s104
    %p113 = scmp.eq.s32.totalorder %s16, 0
    %p114 = por %p112, %p113
    %p115 = scmp.ne.s32.totalorder %s103, %s104
    %p116 = scmp.eq.s32.totalorder %s17, 1
    %p117 = por %p115, %p116
    %p119 = scmp.ne.s32.totalorder %s104, %s118
    %p120 = scmp.eq.s32.totalorder %s17, 0
    %p121 = por %p119, %p120
    %s123 = sadd.s32 %s122, 1
    %p126 = scmp.eq.s32.totalorder %s11, 1
    %p127 = scmp.ne.s32.totalorder %s122, %s124
    %p128 = scmp.eq.s32.totalorder %s11, 0
    %p129 = por %p127, %p128
    %p130 = scmp.ne.s32.totalorder %s122, %s124
    %p131 = scmp.eq.s32.totalorder %s16, 1
    %p132 = por %p130, %p131
    %p133 = scmp.ne.s32.totalorder %s124, %s125
    %p134 = scmp.eq.s32.totalorder %s16, 0
    %p135 = por %p133, %p134
    %p136 = scmp.ne.s32.totalorder %s124, %s125
    %p137 = scmp.eq.s32.totalorder %s17, 1
    %p138 = por %p136, %p137
    %p140 = scmp.ne.s32.totalorder %s125, %s139
    %p141 = scmp.eq.s32.totalorder %s17, 0
    %p142 = por %p140, %p141
    %s143 = ssub.s32 %s18, %s30
    %s144 = ssub.s32 %s19, %s26
    %s145 = sor.u32 %s143, %s144
    %p146 = scmp.eq.s32.totalorder %s145, 0
    %s148 = sadd.s32 %s147, 1
    %s149 = scalar_select %p146, %s147, %s148
    %p152 = pneg %p146
    %p153 = scmp.eq.s32.totalorder %s11, 1
    %p154 = por %p152, %p153
    %p155 = scmp.ne.s32.totalorder %s147, %s150
    %p156 = scmp.eq.s32.totalorder %s11, 0
    %p157 = por %p155, %p156
    %p158 = scmp.ne.s32.totalorder %s147, %s150
    %p159 = scmp.eq.s32.totalorder %s16, 1
    %p160 = por %p158, %p159
    %p161 = scmp.ne.s32.totalorder %s150, %s151
    %p162 = scmp.eq.s32.totalorder %s16, 0
    %p163 = por %p161, %p162
    %p164 = scmp.ne.s32.totalorder %s150, %s151
    %p165 = scmp.eq.s32.totalorder %s17, 1
    %p166 = por %p164, %p165
    %p168 = scmp.ne.s32.totalorder %s151, %s167
    %p169 = scmp.eq.s32.totalorder %s17, 0
    %p170 = por %p168, %p169
    %p171 = scmp.le.s32.totalorder 1, %s11
    %p172 = scmp.lt.s32.totalorder %s11, 3
    %p173 = pnand %p171, %p172
    %p174 = pneg %p173
    // Predicated region
    $region9: #{quadpath_forward.1} parent=5 // pred_check
      _
    $region10: #{quadpath_forward.1} parent=5 // pred_check_branch
      %176 = sbr.rel (%p173) target = $region12
    $region11: #{quadpath_forward.1} parent=5 // pred_region
      %s177 = ssub.s32 %s11, 1
      // Predicated region
      $region13: #{quadpath_forward.1} parent=11 // pred_check
        %p178 = pneg %p72
      $region14: #{quadpath_forward.1} parent=11 // pred_check_branch
        %180 = sbr.rel (%p178) target = $region16
      $region15: #{quadpath_forward.1} parent=11 // pred_region
        _
      $region16: #{quadpath_forward.1} parent=11 // pred_fallthru
        _
      // Predicated region
      $region17: #{quadpath_forward.1} parent=11 // pred_check
        %p181 = pneg %p93
      $region18: #{quadpath_forward.1} parent=11 // pred_check_branch
        %183 = sbr.rel (%p181) target = $region20
      $region19: #{quadpath_forward.1} parent=11 // pred_region
        _
      $region20: #{quadpath_forward.1} parent=11 // pred_fallthru
        _
      // Predicated region
      $region21: #{quadpath_forward.1} parent=11 // pred_check
        %p184 = pneg %p114
      $region22: #{quadpath_forward.1} parent=11 // pred_check_branch
        %186 = sbr.rel (%p184) target = $region24
      $region23: #{quadpath_forward.1} parent=11 // pred_region
        _
      $region24: #{quadpath_forward.1} parent=11 // pred_fallthru
        _
      // Predicated region
      $region25: #{quadpath_forward.1} parent=11 // pred_check
        %p187 = pneg %p135
      $region26: #{quadpath_forward.1} parent=11 // pred_check_branch
        %189 = sbr.rel (%p187) target = $region28
      $region27: #{quadpath_forward.1} parent=11 // pred_region
        _
      $region28: #{quadpath_forward.1} parent=11 // pred_fallthru
        _
    $region12: #{quadpath_forward.1} parent=5 // pred_fallthru
      _
    %p190 = scmp.lt.s32.totalorder %s11, 2
    // Predicated region
    $region29: #{quadpath_forward.1} parent=5 // pred_check
      %p191 = pneg %p190
    $region30: #{quadpath_forward.1} parent=5 // pred_check_branch
      %193 = sbr.rel (%p191) target = $region32
    $region31: #{quadpath_forward.1} parent=5 // pred_region
      // Predicated region
      $region33: #{quadpath_forward.1} parent=31 // pred_check
        %p194 = pneg %p45
      $region34: #{quadpath_forward.1} parent=31 // pred_check_branch
        %196 = sbr.rel (%p194) target = $region36
      $region35: #{quadpath_forward.1} parent=31 // pred_region
        %s197 = smul.u32 2, %s19
        %p198 = scmp.lt.s32.totalorder %s18, 1
        %s199 = scalar_select %p198, %s18, 1
        %p200 = scmp.lt.s32.totalorder %s197, 1
        %s201 = scalar_select %p200, %s197, 1
        %s202 = smul.addr %s199, 2
        %s203 = sadd.s32 %s201, %s202
        %s204 = smul.addr %s203, 4
        %s205 = scalar_lea.vmem %s0, %s204
        %s206 = smul.u32 2, %s19
      $region36: #{quadpath_forward.1} parent=31 // pred_fallthru
        _
    $region32: #{quadpath_forward.1} parent=5 // pred_fallthru
      _
    %p207 = scmp.le.s32.totalorder 1, %s11
    %p208 = scmp.lt.s32.totalorder %s11, 3
    %p209 = pnand %p207, %p208
    %p210 = pneg %p209
    // Predicated region
    $region37: #{quadpath_forward.1} parent=5 // pred_check
      _
    $region38: #{quadpath_forward.1} parent=5 // pred_check_branch
      %212 = sbr.rel (%p209) target = $region40
    $region39: #{quadpath_forward.1} parent=5 // pred_region
      %s213 = ssub.s32 %s11, 1
      %s214 = smul.u32 2, %s21
      %p215 = scmp.lt.s32.totalorder %s20, 1
      %s216 = scalar_select %p215, %s20, 1
      %p217 = scmp.lt.s32.totalorder %s214, 1
      %s218 = scalar_select %p217, %s214, 1
      %s219 = smul.addr %s216, 2
      %s220 = sadd.s32 %s218, %s219
      %s221 = smul.addr %s220, 4
      %s222 = scalar_lea.vmem %s0, %s221
      %p223 = pneg %p51
      %p224 = pneg %p48
      %p225 = pneg %p72
      %p226 = pneg %p69
      %p227 = pneg %p93
      %p228 = pneg %p90
      %p229 = pneg %p114
      %p230 = pneg %p111
      %p231 = pneg %p135
      %p232 = pneg %p132
      %p233 = pneg %p163
      %p234 = pneg %p160
      %s235 = smul.u32 2, %s21
      %p236 = scmp.lt.s32.totalorder %s20, 1
      %s237 = scalar_select %p236, %s20, 1
      %p238 = scmp.lt.s32.totalorder %s235, 1
      %s239 = scalar_select %p238, %s235, 1
      %s240 = smul.addr %s237, 2
      %s241 = sadd.s32 %s239, %s240
      %s242 = smul.addr %s241, 4
      %s243 = scalar_lea.vmem %s5, %s242
      %s244 = smul.u32 2, %s21
      %p245 = scmp.lt.s32.totalorder %s20, 1
      %s246 = scalar_select %p245, %s20, 1
      %p247 = scmp.lt.s32.totalorder %s244, 1
      %s248 = scalar_select %p247, %s244, 1
      %s249 = smul.addr %s246, 2
      %s250 = sadd.s32 %s248, %s249
      %s251 = smul.addr %s250, 4
      %s252 = scalar_lea.vmem %s0, %s251
      %s253 = smul.u32 2, %s21
      %s254 = smul.u32 2, %s21
      %p255 = scmp.lt.s32.totalorder %s20, 1
      %s256 = scalar_select %p255, %s20, 1
      %p257 = scmp.lt.s32.totalorder %s254, 1
      %s258 = scalar_select %p257, %s254, 1
      %s259 = smul.addr %s256, 2
      %s260 = sadd.s32 %s258, %s259
      %s261 = smul.addr %s260, 4
      %s262 = scalar_lea.vmem %s5, %s261
      %s263 = smul.u32 2, %s21
      %v264 = vld [vmem:[%s252] sm:$0xff]
      %v265 = vld [vmem:[%s1] sm:$0xff]
      %v266 = vld [vmem:[%s2] sm:$0xff]
      %268 = vset.pattern.permute.xlu0 0
      %269 = vperm.xlu0 %268, %v266
      %v270 = vpop.permute.xlu0 %269
      %v273 = vcombine.high %v264, %v264
      %vm274 = vcmask 31744
      %v276 = vsel %vm274, %v265, 0
      %vm278 = vcmask 1043456
      %v279 = vsel %vm278, %v264, 0
      %v281 = vsel %vm278, %v273, 0
      %283 = vmatprep.subr.mxu0 0.0
      %284 = vmatpush1.msra.mxu0 0.0
      %285 = vmatprep.subr.mxu0 0.0
      %286 = vmatpush1.msra.mxu0 0.0
      %287 = vmatprep.subr.mxu0 0.0
      %288 = vmatpush1.msra.mxu0 0.0
      %289 = vmatprep.subr.mxu0 0.0
      %290 = vmatpush1.msra.mxu0 0.0
      %291 = vmatprep.subr.mxu0 0.0
      %292 = vmatpush1.msra.mxu0 0.0
      %293 = vmatprep.subr.mxu0 0.0
      %294 = vmatpush1.msra.mxu0 0.0
      %295 = vmatprep.subr.mxu0 0.0
      %296 = vmatpush1.msra.mxu0 0.0
      %297 = vmatprep.subr.mxu0 0.0
      %298 = vmatpush1.msra.mxu0 0.0
      %299 = vmatprep.subr.mxu0 0.0
      %300 = vmatpush1.msra.mxu0 0.0
      %301 = vmatprep.subr.mxu0 0.0
      %302 = vmatpush1.msra.mxu0 0.0
      %303 = vmatprep.subr.mxu0 0.0
      %304 = vmatpush1.msra.mxu0 0.0
      %305 = vmatprep.subr.mxu0 0.0
      %306 = vmatpush1.msra.mxu0 0.0
      %307 = vmatprep.subr.mxu0 0.0
      %308 = vmatpush1.msra.mxu0 0.0
      %309 = vmatprep.subr.mxu0 0.0
      %310 = vmatpush1.msra.mxu0 0.0
      %311 = vmatprep.subr.mxu0 0.0
      %312 = vmatpush1.msra.mxu0 0.0
      %v313 = vand.u32 %v281, 4294901760
      %314 = vmatprep.subr.mxu0 %v313
      %v315 = vand.u32 %v279, 4294901760
      %316 = vmatpush1.msra.mxu0 %v315
      %317 = vmatprep.subr.mxu0 0.0
      %318 = vmatpush2.msra.mxu0 0.0
      %319 = vmatprep.subr.mxu0 0.0
      %320 = vmatpush2.msra.mxu0 0.0
      %321 = vmatprep.subr.mxu0 0.0
      %322 = vmatpush2.msra.mxu0 0.0
      %323 = vmatprep.subr.mxu0 0.0
      %324 = vmatpush2.msra.mxu0 0.0
      %325 = vmatprep.subr.mxu0 0.0
      %326 = vmatpush2.msra.mxu0 0.0
      %327 = vmatprep.subr.mxu0 0.0
      %328 = vmatpush2.msra.mxu0 0.0
      %329 = vmatprep.subr.mxu0 0.0
      %330 = vmatpush2.msra.mxu0 0.0
      %331 = vmatprep.subr.mxu0 0.0
      %332 = vmatpush2.msra.mxu0 0.0
      %333 = vmatprep.subr.mxu0 0.0
      %334 = vmatpush2.msra.mxu0 0.0
      %335 = vmatprep.subr.mxu0 0.0
      %336 = vmatpush2.msra.mxu0 0.0
      %337 = vmatprep.subr.mxu0 0.0
      %338 = vmatpush2.msra.mxu0 0.0
      %339 = vmatprep.subr.mxu0 0.0
      %340 = vmatpush2.msra.mxu0 0.0
      %341 = vmatprep.subr.mxu0 0.0
      %342 = vmatpush2.msra.mxu0 0.0
      %343 = vmatprep.subr.mxu0 0.0
      %344 = vmatpush2.msra.mxu0 0.0
      %345 = vmatprep.subr.mxu0 0.0
      %346 = vmatpush2.msra.mxu0 0.0
      %347 = vmatprep.subr.mxu0 0.0
      %348 = vmatpush2.msra.mxu0 0.0
      %349 = vmatprep.mubr.f32.mxu0 0.0
      %v350 = vand.u32 %v276, 4294901760
      %v351 = vsub.f32 %v276, %v350
      %v352 = vand.u32 %v351, 4294901760
      %v353 = vsub.f32 %v351, %v352
      %v354 = vand.u32 %v353, 4294901760
      %355 = vmatmul.mubr.f32.gmra.mxu0 %v354
      %v356 = vpop.f32.mrf.mxu0
      %v357 = vadd.f32 %v270, %v356
      %v358 = vpop.f32.mrf.mxu0
      %v359 = vadd.f32 %v270, %v358
      %360 = vdwg.mxu0
      %361 = vmatprep.subr.mxu0 0.0
      %362 = vmatpush1.msra.mxu0 0.0
      %363 = vmatprep.subr.mxu0 0.0
      %364 = vmatpush1.msra.mxu0 0.0
      %365 = vmatprep.subr.mxu0 0.0
      %366 = vmatpush1.msra.mxu0 0.0
      %367 = vmatprep.subr.mxu0 0.0
      %368 = vmatpush1.msra.mxu0 0.0
      %369 = vmatprep.subr.mxu0 0.0
      %370 = vmatpush1.msra.mxu0 0.0
      %371 = vmatprep.subr.mxu0 0.0
      %372 = vmatpush1.msra.mxu0 0.0
      %373 = vmatprep.subr.mxu0 0.0
      %374 = vmatpush1.msra.mxu0 0.0
      %375 = vmatprep.subr.mxu0 0.0
      %376 = vmatpush1.msra.mxu0 0.0
      %377 = vmatprep.subr.mxu0 0.0
      %378 = vmatpush1.msra.mxu0 0.0
      %379 = vmatprep.subr.mxu0 0.0
      %380 = vmatpush1.msra.mxu0 0.0
      %381 = vmatprep.subr.mxu0 0.0
      %382 = vmatpush1.msra.mxu0 0.0
      %383 = vmatprep.subr.mxu0 0.0
      %384 = vmatpush1.msra.mxu0 0.0
      %385 = vmatprep.subr.mxu0 0.0
      %386 = vmatpush1.msra.mxu0 0.0
      %387 = vmatprep.subr.mxu0 0.0
      %388 = vmatpush1.msra.mxu0 0.0
      %389 = vmatprep.subr.mxu0 0.0
      %390 = vmatpush1.msra.mxu0 0.0
      %v391 = vand.u32 %v281, 4294901760
      %v392 = vsub.f32 %v281, %v391
      %v393 = vand.u32 %v392, 4294901760
      %v394 = vsub.f32 %v392, %v393
      %v395 = vand.u32 %v394, 4294901760
      %396 = vmatprep.subr.mxu0 %v395
      %v397 = vand.u32 %v279, 4294901760
      %v398 = vsub.f32 %v279, %v397
      %v399 = vand.u32 %v398, 4294901760
      %v400 = vsub.f32 %v398, %v399
      %v401 = vand.u32 %v400, 4294901760
      %402 = vmatpush1.msra.mxu0 %v401
      %403 = vmatprep.subr.mxu0 0.0
      %404 = vmatpush2.msra.mxu0 0.0
      %405 = vmatprep.subr.mxu0 0.0
      %406 = vmatpush2.msra.mxu0 0.0
      %407 = vmatprep.subr.mxu0 0.0
      %408 = vmatpush2.msra.mxu0 0.0
      %409 = vmatprep.subr.mxu0 0.0
      %410 = vmatpush2.msra.mxu0 0.0
      %411 = vmatprep.subr.mxu0 0.0
      %412 = vmatpush2.msra.mxu0 0.0
      %413 = vmatprep.subr.mxu0 0.0
      %414 = vmatpush2.msra.mxu0 0.0
      %415 = vmatprep.subr.mxu0 0.0
      %416 = vmatpush2.msra.mxu0 0.0
      %417 = vmatprep.subr.mxu0 0.0
      %418 = vmatpush2.msra.mxu0 0.0
      %419 = vmatprep.subr.mxu0 0.0
      %420 = vmatpush2.msra.mxu0 0.0
      %421 = vmatprep.subr.mxu0 0.0
      %422 = vmatpush2.msra.mxu0 0.0
      %423 = vmatprep.subr.mxu0 0.0
      %424 = vmatpush2.msra.mxu0 0.0
      %425 = vmatprep.subr.mxu0 0.0
      %426 = vmatpush2.msra.mxu0 0.0
      %427 = vmatprep.subr.mxu0 0.0
      %428 = vmatpush2.msra.mxu0 0.0
      %429 = vmatprep.subr.mxu0 0.0
      %430 = vmatpush2.msra.mxu0 0.0
      %431 = vmatprep.subr.mxu0 0.0
      %432 = vmatpush2.msra.mxu0 0.0
      %433 = vmatprep.subr.mxu0 0.0
      %434 = vmatpush2.msra.mxu0 0.0
      %435 = vmatprep.mubr.f32.mxu0 0.0
      %v436 = vand.u32 %v276, 4294901760
      %437 = vmatmul.mubr.f32.gmra.mxu0 %v436
      %v438 = vpop.f32.mrf.mxu0
      %v439 = vadd.f32 %v357, %v438
      %v440 = vpop.f32.mrf.mxu0
      %v441 = vadd.f32 %v359, %v440
      %442 = vdwg.mxu0
      %443 = vmatprep.subr.mxu0 0.0
      %444 = vmatpush1.msra.mxu0 0.0
      %445 = vmatprep.subr.mxu0 0.0
      %446 = vmatpush1.msra.mxu0 0.0
      %447 = vmatprep.subr.mxu0 0.0
      %448 = vmatpush1.msra.mxu0 0.0
      %449 = vmatprep.subr.mxu0 0.0
      %450 = vmatpush1.msra.mxu0 0.0
      %451 = vmatprep.subr.mxu0 0.0
      %452 = vmatpush1.msra.mxu0 0.0
      %453 = vmatprep.subr.mxu0 0.0
      %454 = vmatpush1.msra.mxu0 0.0
      %455 = vmatprep.subr.mxu0 0.0
      %456 = vmatpush1.msra.mxu0 0.0
      %457 = vmatprep.subr.mxu0 0.0
      %458 = vmatpush1.msra.mxu0 0.0
      %459 = vmatprep.subr.mxu0 0.0
      %460 = vmatpush1.msra.mxu0 0.0
      %461 = vmatprep.subr.mxu0 0.0
      %462 = vmatpush1.msra.mxu0 0.0
      %463 = vmatprep.subr.mxu0 0.0
      %464 = vmatpush1.msra.mxu0 0.0
      %465 = vmatprep.subr.mxu0 0.0
      %466 = vmatpush1.msra.mxu0 0.0
      %467 = vmatprep.subr.mxu0 0.0
      %468 = vmatpush1.msra.mxu0 0.0
      %469 = vmatprep.subr.mxu0 0.0
      %470 = vmatpush1.msra.mxu0 0.0
      %471 = vmatprep.subr.mxu0 0.0
      %472 = vmatpush1.msra.mxu0 0.0
      %v473 = vand.u32 %v281, 4294901760
      %v474 = vsub.f32 %v281, %v473
      %475 = vmatprep.subr.mxu0 %v474
      %v476 = vand.u32 %v279, 4294901760
      %v477 = vsub.f32 %v279, %v476
      %478 = vmatpush1.msra.mxu0 %v477
      %479 = vmatprep.subr.mxu0 0.0
      %480 = vmatpush2.msra.mxu0 0.0
      %481 = vmatprep.subr.mxu0 0.0
      %482 = vmatpush2.msra.mxu0 0.0
      %483 = vmatprep.subr.mxu0 0.0
      %484 = vmatpush2.msra.mxu0 0.0
      %485 = vmatprep.subr.mxu0 0.0
      %486 = vmatpush2.msra.mxu0 0.0
      %487 = vmatprep.subr.mxu0 0.0
      %488 = vmatpush2.msra.mxu0 0.0
      %489 = vmatprep.subr.mxu0 0.0
      %490 = vmatpush2.msra.mxu0 0.0
      %491 = vmatprep.subr.mxu0 0.0
      %492 = vmatpush2.msra.mxu0 0.0
      %493 = vmatprep.subr.mxu0 0.0
      %494 = vmatpush2.msra.mxu0 0.0
      %495 = vmatprep.subr.mxu0 0.0
      %496 = vmatpush2.msra.mxu0 0.0
      %497 = vmatprep.subr.mxu0 0.0
      %498 = vmatpush2.msra.mxu0 0.0
      %499 = vmatprep.subr.mxu0 0.0
      %500 = vmatpush2.msra.mxu0 0.0
      %501 = vmatprep.subr.mxu0 0.0
      %502 = vmatpush2.msra.mxu0 0.0
      %503 = vmatprep.subr.mxu0 0.0
      %504 = vmatpush2.msra.mxu0 0.0
      %505 = vmatprep.subr.mxu0 0.0
      %506 = vmatpush2.msra.mxu0 0.0
      %507 = vmatprep.subr.mxu0 0.0
      %508 = vmatpush2.msra.mxu0 0.0
      %509 = vmatprep.subr.mxu0 0.0
      %510 = vmatpush2.msra.mxu0 0.0
      %511 = vmatprep.mubr.f32.mxu0 0.0
      %v512 = vand.u32 %v276, 4294901760
      %v513 = vsub.f32 %v276, %v512
      %514 = vmatmul.mubr.f32.gmra.mxu0 %v513
      %v515 = vpop.f32.mrf.mxu0
      %v516 = vadd.f32 %v439, %v515
      %v517 = vpop.f32.mrf.mxu0
      %v518 = vadd.f32 %v441, %v517
      %519 = vdwg.mxu0
      %520 = vmatprep.subr.mxu0 0.0
      %521 = vmatpush1.msra.mxu0 0.0
      %522 = vmatprep.subr.mxu0 0.0
      %523 = vmatpush1.msra.mxu0 0.0
      %524 = vmatprep.subr.mxu0 0.0
      %525 = vmatpush1.msra.mxu0 0.0
      %526 = vmatprep.subr.mxu0 0.0
      %527 = vmatpush1.msra.mxu0 0.0
      %528 = vmatprep.subr.mxu0 0.0
      %529 = vmatpush1.msra.mxu0 0.0
      %530 = vmatprep.subr.mxu0 0.0
      %531 = vmatpush1.msra.mxu0 0.0
      %532 = vmatprep.subr.mxu0 0.0
      %533 = vmatpush1.msra.mxu0 0.0
      %534 = vmatprep.subr.mxu0 0.0
      %535 = vmatpush1.msra.mxu0 0.0
      %536 = vmatprep.subr.mxu0 0.0
      %537 = vmatpush1.msra.mxu0 0.0
      %538 = vmatprep.subr.mxu0 0.0
      %539 = vmatpush1.msra.mxu0 0.0
      %540 = vmatprep.subr.mxu0 0.0
      %541 = vmatpush1.msra.mxu0 0.0
      %542 = vmatprep.subr.mxu0 0.0
      %543 = vmatpush1.msra.mxu0 0.0
      %544 = vmatprep.subr.mxu0 0.0
      %545 = vmatpush1.msra.mxu0 0.0
      %546 = vmatprep.subr.mxu0 0.0
      %547 = vmatpush1.msra.mxu0 0.0
      %548 = vmatprep.subr.mxu0 0.0
      %549 = vmatpush1.msra.mxu0 0.0
      %v550 = vand.u32 %v281, 4294901760
      %551 = vmatprep.subr.mxu0 %v550
      %v552 = vand.u32 %v279, 4294901760
      %553 = vmatpush1.msra.mxu0 %v552
      %554 = vmatprep.subr.mxu0 0.0
      %555 = vmatpush2.msra.mxu0 0.0
      %556 = vmatprep.subr.mxu0 0.0
      %557 = vmatpush2.msra.mxu0 0.0
      %558 = vmatprep.subr.mxu0 0.0
      %559 = vmatpush2.msra.mxu0 0.0
      %560 = vmatprep.subr.mxu0 0.0
      %561 = vmatpush2.msra.mxu0 0.0
      %562 = vmatprep.subr.mxu0 0.0
      %563 = vmatpush2.msra.mxu0 0.0
      %564 = vmatprep.subr.mxu0 0.0
      %565 = vmatpush2.msra.mxu0 0.0
      %566 = vmatprep.subr.mxu0 0.0
      %567 = vmatpush2.msra.mxu0 0.0
      %568 = vmatprep.subr.mxu0 0.0
      %569 = vmatpush2.msra.mxu0 0.0
      %570 = vmatprep.subr.mxu0 0.0
      %571 = vmatpush2.msra.mxu0 0.0
      %572 = vmatprep.subr.mxu0 0.0
      %573 = vmatpush2.msra.mxu0 0.0
      %574 = vmatprep.subr.mxu0 0.0
      %575 = vmatpush2.msra.mxu0 0.0
      %576 = vmatprep.subr.mxu0 0.0
      %577 = vmatpush2.msra.mxu0 0.0
      %578 = vmatprep.subr.mxu0 0.0
      %579 = vmatpush2.msra.mxu0 0.0
      %580 = vmatprep.subr.mxu0 0.0
      %581 = vmatpush2.msra.mxu0 0.0
      %582 = vmatprep.subr.mxu0 0.0
      %583 = vmatpush2.msra.mxu0 0.0
      %584 = vmatprep.subr.mxu0 0.0
      %585 = vmatpush2.msra.mxu0 0.0
      %586 = vmatprep.mubr.f32.mxu0 0.0
      %v587 = vand.u32 %v276, 4294901760
      %v588 = vsub.f32 %v276, %v587
      %v589 = vand.u32 %v588, 4294901760
      %590 = vmatmul.mubr.f32.gmra.mxu0 %v589
      %v591 = vpop.f32.mrf.mxu0
      %v592 = vadd.f32 %v516, %v591
      %v593 = vpop.f32.mrf.mxu0
      %v594 = vadd.f32 %v518, %v593
      %595 = vdwg.mxu0
      %596 = vmatprep.subr.mxu0 0.0
      %597 = vmatpush1.msra.mxu0 0.0
      %598 = vmatprep.subr.mxu0 0.0
      %599 = vmatpush1.msra.mxu0 0.0
      %600 = vmatprep.subr.mxu0 0.0
      %601 = vmatpush1.msra.mxu0 0.0
      %602 = vmatprep.subr.mxu0 0.0
      %603 = vmatpush1.msra.mxu0 0.0
      %604 = vmatprep.subr.mxu0 0.0
      %605 = vmatpush1.msra.mxu0 0.0
      %606 = vmatprep.subr.mxu0 0.0
      %607 = vmatpush1.msra.mxu0 0.0
      %608 = vmatprep.subr.mxu0 0.0
      %609 = vmatpush1.msra.mxu0 0.0
      %610 = vmatprep.subr.mxu0 0.0
      %611 = vmatpush1.msra.mxu0 0.0
      %612 = vmatprep.subr.mxu0 0.0
      %613 = vmatpush1.msra.mxu0 0.0
      %614 = vmatprep.subr.mxu0 0.0
      %615 = vmatpush1.msra.mxu0 0.0
      %616 = vmatprep.subr.mxu0 0.0
      %617 = vmatpush1.msra.mxu0 0.0
      %618 = vmatprep.subr.mxu0 0.0
      %619 = vmatpush1.msra.mxu0 0.0
      %620 = vmatprep.subr.mxu0 0.0
      %621 = vmatpush1.msra.mxu0 0.0
      %622 = vmatprep.subr.mxu0 0.0
      %623 = vmatpush1.msra.mxu0 0.0
      %624 = vmatprep.subr.mxu0 0.0
      %625 = vmatpush1.msra.mxu0 0.0
      %v626 = vand.u32 %v281, 4294901760
      %v627 = vsub.f32 %v281, %v626
      %v628 = vand.u32 %v627, 4294901760
      %629 = vmatprep.subr.mxu0 %v628
      %v630 = vand.u32 %v279, 4294901760
      %v631 = vsub.f32 %v279, %v630
      %v632 = vand.u32 %v631, 4294901760
      %633 = vmatpush1.msra.mxu0 %v632
      %634 = vmatprep.subr.mxu0 0.0
      %635 = vmatpush2.msra.mxu0 0.0
      %636 = vmatprep.subr.mxu0 0.0
      %637 = vmatpush2.msra.mxu0 0.0
      %638 = vmatprep.subr.mxu0 0.0
      %639 = vmatpush2.msra.mxu0 0.0
      %640 = vmatprep.subr.mxu0 0.0
      %641 = vmatpush2.msra.mxu0 0.0
      %642 = vmatprep.subr.mxu0 0.0
      %643 = vmatpush2.msra.mxu0 0.0
      %644 = vmatprep.subr.mxu0 0.0
      %645 = vmatpush2.msra.mxu0 0.0
      %646 = vmatprep.subr.mxu0 0.0
      %647 = vmatpush2.msra.mxu0 0.0
      %648 = vmatprep.subr.mxu0 0.0
      %649 = vmatpush2.msra.mxu0 0.0
      %650 = vmatprep.subr.mxu0 0.0
      %651 = vmatpush2.msra.mxu0 0.0
      %652 = vmatprep.subr.mxu0 0.0
      %653 = vmatpush2.msra.mxu0 0.0
      %654 = vmatprep.subr.mxu0 0.0
      %655 = vmatpush2.msra.mxu0 0.0
      %656 = vmatprep.subr.mxu0 0.0
      %657 = vmatpush2.msra.mxu0 0.0
      %658 = vmatprep.subr.mxu0 0.0
      %659 = vmatpush2.msra.mxu0 0.0
      %660 = vmatprep.subr.mxu0 0.0
      %661 = vmatpush2.msra.mxu0 0.0
      %662 = vmatprep.subr.mxu0 0.0
      %663 = vmatpush2.msra.mxu0 0.0
      %664 = vmatprep.subr.mxu0 0.0
      %665 = vmatpush2.msra.mxu0 0.0
      %666 = vmatprep.mubr.f32.mxu0 0.0
      %v667 = vand.u32 %v276, 4294901760
      %668 = vmatmul.mubr.f32.gmra.mxu0 %v667
      %v669 = vpop.f32.mrf.mxu0
      %v670 = vadd.f32 %v592, %v669
      %v671 = vpop.f32.mrf.mxu0
      %v672 = vadd.f32 %v594, %v671
      %673 = vdwg.mxu0
      %674 = vmatprep.subr.mxu0 0.0
      %675 = vmatpush1.msra.mxu0 0.0
      %676 = vmatprep.subr.mxu0 0.0
      %677 = vmatpush1.msra.mxu0 0.0
      %678 = vmatprep.subr.mxu0 0.0
      %679 = vmatpush1.msra.mxu0 0.0
      %680 = vmatprep.subr.mxu0 0.0
      %681 = vmatpush1.msra.mxu0 0.0
      %682 = vmatprep.subr.mxu0 0.0
      %683 = vmatpush1.msra.mxu0 0.0
      %684 = vmatprep.subr.mxu0 0.0
      %685 = vmatpush1.msra.mxu0 0.0
      %686 = vmatprep.subr.mxu0 0.0
      %687 = vmatpush1.msra.mxu0 0.0
      %688 = vmatprep.subr.mxu0 0.0
      %689 = vmatpush1.msra.mxu0 0.0
      %690 = vmatprep.subr.mxu0 0.0
      %691 = vmatpush1.msra.mxu0 0.0
      %692 = vmatprep.subr.mxu0 0.0
      %693 = vmatpush1.msra.mxu0 0.0
      %694 = vmatprep.subr.mxu0 0.0
      %695 = vmatpush1.msra.mxu0 0.0
      %696 = vmatprep.subr.mxu0 0.0
      %697 = vmatpush1.msra.mxu0 0.0
      %698 = vmatprep.subr.mxu0 0.0
      %699 = vmatpush1.msra.mxu0 0.0
      %700 = vmatprep.subr.mxu0 0.0
      %701 = vmatpush1.msra.mxu0 0.0
      %702 = vmatprep.subr.mxu0 0.0
      %703 = vmatpush1.msra.mxu0 0.0
      %v704 = vand.u32 %v281, 4294901760
      %705 = vmatprep.subr.mxu0 %v704
      %v706 = vand.u32 %v279, 4294901760
      %707 = vmatpush1.msra.mxu0 %v706
      %708 = vmatprep.subr.mxu0 0.0
      %709 = vmatpush2.msra.mxu0 0.0
      %710 = vmatprep.subr.mxu0 0.0
      %711 = vmatpush2.msra.mxu0 0.0
      %712 = vmatprep.subr.mxu0 0.0
      %713 = vmatpush2.msra.mxu0 0.0
      %714 = vmatprep.subr.mxu0 0.0
      %715 = vmatpush2.msra.mxu0 0.0
      %716 = vmatprep.subr.mxu0 0.0
      %717 = vmatpush2.msra.mxu0 0.0
      %718 = vmatprep.subr.mxu0 0.0
      %719 = vmatpush2.msra.mxu0 0.0
      %720 = vmatprep.subr.mxu0 0.0
      %721 = vmatpush2.msra.mxu0 0.0
      %722 = vmatprep.subr.mxu0 0.0
      %723 = vmatpush2.msra.mxu0 0.0
      %724 = vmatprep.subr.mxu0 0.0
      %725 = vmatpush2.msra.mxu0 0.0
      %726 = vmatprep.subr.mxu0 0.0
      %727 = vmatpush2.msra.mxu0 0.0
      %728 = vmatprep.subr.mxu0 0.0
      %729 = vmatpush2.msra.mxu0 0.0
      %730 = vmatprep.subr.mxu0 0.0
      %731 = vmatpush2.msra.mxu0 0.0
      %732 = vmatprep.subr.mxu0 0.0
      %733 = vmatpush2.msra.mxu0 0.0
      %734 = vmatprep.subr.mxu0 0.0
      %735 = vmatpush2.msra.mxu0 0.0
      %736 = vmatprep.subr.mxu0 0.0
      %737 = vmatpush2.msra.mxu0 0.0
      %738 = vmatprep.subr.mxu0 0.0
      %739 = vmatpush2.msra.mxu0 0.0
      %740 = vmatprep.mubr.f32.mxu0 0.0
      %v741 = vand.u32 %v276, 4294901760
      %742 = vmatmul.mubr.f32.gmra.mxu0 %v741
      %v743 = vpop.f32.mrf.mxu0
      %v744 = vadd.f32 %v670, %v743
      %v745 = vpop.f32.mrf.mxu0
      %v746 = vadd.f32 %v672, %v745
      %747 = vdwg.mxu0
      %v748 = vmul.f32 %v744, %v744
      %v749 = vmul.f32 %v746, %v746
      %v750 = vld [vmem:[%s3] sm:$0xf]
      %v751 = vld [vmem:[%s4] sm:$0xf]
      %753 = vset.pattern.permute.xlu0 0
      %754 = vperm.xlu0 %753, %v751
      %v755 = vpop.permute.xlu0 %754
      %vm757 = vcmask 64512
      %v759 = vsel %vm757, %v750, 0
      %761 = vmatprep.subr.mxu0 0.0
      %762 = vmatpush1.msra.mxu0 0.0
      %763 = vmatprep.subr.mxu0 0.0
      %764 = vmatpush1.msra.mxu0 0.0
      %765 = vmatprep.subr.mxu0 0.0
      %766 = vmatpush1.msra.mxu0 0.0
      %767 = vmatprep.subr.mxu0 0.0
      %768 = vmatpush1.msra.mxu0 0.0
      %769 = vmatprep.subr.mxu0 0.0
      %770 = vmatpush1.msra.mxu0 0.0
      %771 = vmatprep.subr.mxu0 0.0
      %772 = vmatpush1.msra.mxu0 0.0
      %773 = vmatprep.subr.mxu0 0.0
      %774 = vmatpush1.msra.mxu0 0.0
      %775 = vmatprep.subr.mxu0 0.0
      %776 = vmatpush1.msra.mxu0 0.0
      %777 = vmatprep.subr.mxu0 0.0
      %778 = vmatpush1.msra.mxu0 0.0
      %779 = vmatprep.subr.mxu0 0.0
      %780 = vmatpush1.msra.mxu0 0.0
      %781 = vmatprep.subr.mxu0 0.0
      %782 = vmatpush1.msra.mxu0 0.0
      %783 = vmatprep.subr.mxu0 0.0
      %784 = vmatpush1.msra.mxu0 0.0
      %785 = vmatprep.subr.mxu0 0.0
      %786 = vmatpush1.msra.mxu0 0.0
      %787 = vmatprep.subr.mxu0 0.0
      %788 = vmatpush1.msra.mxu0 0.0
      %789 = vmatprep.subr.mxu0 0.0
      %790 = vmatpush1.msra.mxu0 0.0
      %v791 = vand.u32 %v749, 4294901760
      %792 = vmatprep.subr.mxu0 %v791
      %v793 = vand.u32 %v748, 4294901760
      %794 = vmatpush1.msra.mxu0 %v793
      %795 = vmatprep.subr.mxu0 0.0
      %796 = vmatpush2.msra.mxu0 0.0
      %797 = vmatprep.subr.mxu0 0.0
      %798 = vmatpush2.msra.mxu0 0.0
      %799 = vmatprep.subr.mxu0 0.0
      %800 = vmatpush2.msra.mxu0 0.0
      %801 = vmatprep.subr.mxu0 0.0
      %802 = vmatpush2.msra.mxu0 0.0
      %803 = vmatprep.subr.mxu0 0.0
      %804 = vmatpush2.msra.mxu0 0.0
      %805 = vmatprep.subr.mxu0 0.0
      %806 = vmatpush2.msra.mxu0 0.0
      %807 = vmatprep.subr.mxu0 0.0
      %808 = vmatpush2.msra.mxu0 0.0
      %809 = vmatprep.subr.mxu0 0.0
      %810 = vmatpush2.msra.mxu0 0.0
      %811 = vmatprep.subr.mxu0 0.0
      %812 = vmatpush2.msra.mxu0 0.0
      %813 = vmatprep.subr.mxu0 0.0
      %814 = vmatpush2.msra.mxu0 0.0
      %815 = vmatprep.subr.mxu0 0.0
      %816 = vmatpush2.msra.mxu0 0.0
      %817 = vmatprep.subr.mxu0 0.0
      %818 = vmatpush2.msra.mxu0 0.0
      %819 = vmatprep.subr.mxu0 0.0
      %820 = vmatpush2.msra.mxu0 0.0
      %821 = vmatprep.subr.mxu0 0.0
      %822 = vmatpush2.msra.mxu0 0.0
      %823 = vmatprep.subr.mxu0 0.0
      %824 = vmatpush2.msra.mxu0 0.0
      %825 = vmatprep.subr.mxu0 0.0
      %826 = vmatpush2.msra.mxu0 0.0
      %827 = vmatprep.mubr.f32.mxu0 0.0
      %v828 = vand.u32 %v759, 4294901760
      %v829 = vsub.f32 %v759, %v828
      %v830 = vand.u32 %v829, 4294901760
      %v831 = vsub.f32 %v829, %v830
      %v832 = vand.u32 %v831, 4294901760
      %833 = vmatmul.mubr.f32.gmra.mxu0 %v832
      %v834 = vpop.f32.mrf.mxu0
      %v835 = vadd.f32 %v755, %v834
      %v836 = vpop.f32.mrf.mxu0
      %v837 = vadd.f32 %v755, %v836
      %838 = vdwg.mxu0
      %839 = vmatprep.subr.mxu0 0.0
      %840 = vmatpush1.msra.mxu0 0.0
      %841 = vmatprep.subr.mxu0 0.0
      %842 = vmatpush1.msra.mxu0 0.0
      %843 = vmatprep.subr.mxu0 0.0
      %844 = vmatpush1.msra.mxu0 0.0
      %845 = vmatprep.subr.mxu0 0.0
      %846 = vmatpush1.msra.mxu0 0.0
      %847 = vmatprep.subr.mxu0 0.0
      %848 = vmatpush1.msra.mxu0 0.0
      %849 = vmatprep.subr.mxu0 0.0
      %850 = vmatpush1.msra.mxu0 0.0
      %851 = vmatprep.subr.mxu0 0.0
      %852 = vmatpush1.msra.mxu0 0.0
      %853 = vmatprep.subr.mxu0 0.0
      %854 = vmatpush1.msra.mxu0 0.0
      %855 = vmatprep.subr.mxu0 0.0
      %856 = vmatpush1.msra.mxu0 0.0
      %857 = vmatprep.subr.mxu0 0.0
      %858 = vmatpush1.msra.mxu0 0.0
      %859 = vmatprep.subr.mxu0 0.0
      %860 = vmatpush1.msra.mxu0 0.0
      %861 = vmatprep.subr.mxu0 0.0
      %862 = vmatpush1.msra.mxu0 0.0
      %863 = vmatprep.subr.mxu0 0.0
      %864 = vmatpush1.msra.mxu0 0.0
      %865 = vmatprep.subr.mxu0 0.0
      %866 = vmatpush1.msra.mxu0 0.0
      %867 = vmatprep.subr.mxu0 0.0
      %868 = vmatpush1.msra.mxu0 0.0
      %v869 = vand.u32 %v749, 4294901760
      %v870 = vsub.f32 %v749, %v869
      %v871 = vand.u32 %v870, 4294901760
      %v872 = vsub.f32 %v870, %v871
      %v873 = vand.u32 %v872, 4294901760
      %874 = vmatprep.subr.mxu0 %v873
      %v875 = vand.u32 %v748, 4294901760
      %v876 = vsub.f32 %v748, %v875
      %v877 = vand.u32 %v876, 4294901760
      %v878 = vsub.f32 %v876, %v877
      %v879 = vand.u32 %v878, 4294901760
      %880 = vmatpush1.msra.mxu0 %v879
      %881 = vmatprep.subr.mxu0 0.0
      %882 = vmatpush2.msra.mxu0 0.0
      %883 = vmatprep.subr.mxu0 0.0
      %884 = vmatpush2.msra.mxu0 0.0
      %885 = vmatprep.subr.mxu0 0.0
      %886 = vmatpush2.msra.mxu0 0.0
      %887 = vmatprep.subr.mxu0 0.0
      %888 = vmatpush2.msra.mxu0 0.0
      %889 = vmatprep.subr.mxu0 0.0
      %890 = vmatpush2.msra.mxu0 0.0
      %891 = vmatprep.subr.mxu0 0.0
      %892 = vmatpush2.msra.mxu0 0.0
      %893 = vmatprep.subr.mxu0 0.0
      %894 = vmatpush2.msra.mxu0 0.0
      %895 = vmatprep.subr.mxu0 0.0
      %896 = vmatpush2.msra.mxu0 0.0
      %897 = vmatprep.subr.mxu0 0.0
      %898 = vmatpush2.msra.mxu0 0.0
      %899 = vmatprep.subr.mxu0 0.0
      %900 = vmatpush2.msra.mxu0 0.0
      %901 = vmatprep.subr.mxu0 0.0
      %902 = vmatpush2.msra.mxu0 0.0
      %903 = vmatprep.subr.mxu0 0.0
      %904 = vmatpush2.msra.mxu0 0.0
      %905 = vmatprep.subr.mxu0 0.0
      %906 = vmatpush2.msra.mxu0 0.0
      %907 = vmatprep.subr.mxu0 0.0
      %908 = vmatpush2.msra.mxu0 0.0
      %909 = vmatprep.subr.mxu0 0.0
      %910 = vmatpush2.msra.mxu0 0.0
      %911 = vmatprep.subr.mxu0 0.0
      %912 = vmatpush2.msra.mxu0 0.0
      %913 = vmatprep.mubr.f32.mxu0 0.0
      %v914 = vand.u32 %v759, 4294901760
      %915 = vmatmul.mubr.f32.gmra.mxu0 %v914
      %v916 = vpop.f32.mrf.mxu0
      %v917 = vadd.f32 %v835, %v916
      %v918 = vpop.f32.mrf.mxu0
      %v919 = vadd.f32 %v837, %v918
      %920 = vdwg.mxu0
      %921 = vmatprep.subr.mxu0 0.0
      %922 = vmatpush1.msra.mxu0 0.0
      %923 = vmatprep.subr.mxu0 0.0
      %924 = vmatpush1.msra.mxu0 0.0
      %925 = vmatprep.subr.mxu0 0.0
      %926 = vmatpush1.msra.mxu0 0.0
      %927 = vmatprep.subr.mxu0 0.0
      %928 = vmatpush1.msra.mxu0 0.0
      %929 = vmatprep.subr.mxu0 0.0
      %930 = vmatpush1.msra.mxu0 0.0
      %931 = vmatprep.subr.mxu0 0.0
      %932 = vmatpush1.msra.mxu0 0.0
      %933 = vmatprep.subr.mxu0 0.0
      %934 = vmatpush1.msra.mxu0 0.0
      %935 = vmatprep.subr.mxu0 0.0
      %936 = vmatpush1.msra.mxu0 0.0
      %937 = vmatprep.subr.mxu0 0.0
      %938 = vmatpush1.msra.mxu0 0.0
      %939 = vmatprep.subr.mxu0 0.0
      %940 = vmatpush1.msra.mxu0 0.0
      %941 = vmatprep.subr.mxu0 0.0
      %942 = vmatpush1.msra.mxu0 0.0
      %943 = vmatprep.subr.mxu0 0.0
      %944 = vmatpush1.msra.mxu0 0.0
      %945 = vmatprep.subr.mxu0 0.0
      %946 = vmatpush1.msra.mxu0 0.0
      %947 = vmatprep.subr.mxu0 0.0
      %948 = vmatpush1.msra.mxu0 0.0
      %949 = vmatprep.subr.mxu0 0.0
      %950 = vmatpush1.msra.mxu0 0.0
      %v951 = vand.u32 %v749, 4294901760
      %v952 = vsub.f32 %v749, %v951
      %953 = vmatprep.subr.mxu0 %v952
      %v954 = vand.u32 %v748, 4294901760
      %v955 = vsub.f32 %v748, %v954
      %956 = vmatpush1.msra.mxu0 %v955
      %957 = vmatprep.subr.mxu0 0.0
      %958 = vmatpush2.msra.mxu0 0.0
      %959 = vmatprep.subr.mxu0 0.0
      %960 = vmatpush2.msra.mxu0 0.0
      %961 = vmatprep.subr.mxu0 0.0
      %962 = vmatpush2.msra.mxu0 0.0
      %963 = vmatprep.subr.mxu0 0.0
      %964 = vmatpush2.msra.mxu0 0.0
      %965 = vmatprep.subr.mxu0 0.0
      %966 = vmatpush2.msra.mxu0 0.0
      %967 = vmatprep.subr.mxu0 0.0
      %968 = vmatpush2.msra.mxu0 0.0
      %969 = vmatprep.subr.mxu0 0.0
      %970 = vmatpush2.msra.mxu0 0.0
      %971 = vmatprep.subr.mxu0 0.0
      %972 = vmatpush2.msra.mxu0 0.0
      %973 = vmatprep.subr.mxu0 0.0
      %974 = vmatpush2.msra.mxu0 0.0
      %975 = vmatprep.subr.mxu0 0.0
      %976 = vmatpush2.msra.mxu0 0.0
      %977 = vmatprep.subr.mxu0 0.0
      %978 = vmatpush2.msra.mxu0 0.0
      %979 = vmatprep.subr.mxu0 0.0
      %980 = vmatpush2.msra.mxu0 0.0
      %981 = vmatprep.subr.mxu0 0.0
      %982 = vmatpush2.msra.mxu0 0.0
      %983 = vmatprep.subr.mxu0 0.0
      %984 = vmatpush2.msra.mxu0 0.0
      %985 = vmatprep.subr.mxu0 0.0
      %986 = vmatpush2.msra.mxu0 0.0
      %987 = vmatprep.subr.mxu0 0.0
      %988 = vmatpush2.msra.mxu0 0.0
      %989 = vmatprep.mubr.f32.mxu0 0.0
      %v990 = vand.u32 %v759, 4294901760
      %v991 = vsub.f32 %v759, %v990
      %992 = vmatmul.mubr.f32.gmra.mxu0 %v991
      %v993 = vpop.f32.mrf.mxu0
      %v994 = vadd.f32 %v917, %v993
      %v995 = vpop.f32.mrf.mxu0
      %v996 = vadd.f32 %v919, %v995
      %997 = vdwg.mxu0
      %998 = vmatprep.subr.mxu0 0.0
      %999 = vmatpush1.msra.mxu0 0.0
      %1000 = vmatprep.subr.mxu0 0.0
      %1001 = vmatpush1.msra.mxu0 0.0
      %1002 = vmatprep.subr.mxu0 0.0
      %1003 = vmatpush1.msra.mxu0 0.0
      %1004 = vmatprep.subr.mxu0 0.0
      %1005 = vmatpush1.msra.mxu0 0.0
      %1006 = vmatprep.subr.mxu0 0.0
      %1007 = vmatpush1.msra.mxu0 0.0
      %1008 = vmatprep.subr.mxu0 0.0
      %1009 = vmatpush1.msra.mxu0 0.0
      %1010 = vmatprep.subr.mxu0 0.0
      %1011 = vmatpush1.msra.mxu0 0.0
      %1012 = vmatprep.subr.mxu0 0.0
      %1013 = vmatpush1.msra.mxu0 0.0
      %1014 = vmatprep.subr.mxu0 0.0
      %1015 = vmatpush1.msra.mxu0 0.0
      %1016 = vmatprep.subr.mxu0 0.0
      %1017 = vmatpush1.msra.mxu0 0.0
      %1018 = vmatprep.subr.mxu0 0.0
      %1019 = vmatpush1.msra.mxu0 0.0
      %1020 = vmatprep.subr.mxu0 0.0
      %1021 = vmatpush1.msra.mxu0 0.0
      %1022 = vmatprep.subr.mxu0 0.0
      %1023 = vmatpush1.msra.mxu0 0.0
      %1024 = vmatprep.subr.mxu0 0.0
      %1025 = vmatpush1.msra.mxu0 0.0
      %1026 = vmatprep.subr.mxu0 0.0
      %1027 = vmatpush1.msra.mxu0 0.0
      %v1028 = vand.u32 %v749, 4294901760
      %1029 = vmatprep.subr.mxu0 %v1028
      %v1030 = vand.u32 %v748, 4294901760
      %1031 = vmatpush1.msra.mxu0 %v1030
      %1032 = vmatprep.subr.mxu0 0.0
      %1033 = vmatpush2.msra.mxu0 0.0
      %1034 = vmatprep.subr.mxu0 0.0
      %1035 = vmatpush2.msra.mxu0 0.0
      %1036 = vmatprep.subr.mxu0 0.0
      %1037 = vmatpush2.msra.mxu0 0.0
      %1038 = vmatprep.subr.mxu0 0.0
      %1039 = vmatpush2.msra.mxu0 0.0
      %1040 = vmatprep.subr.mxu0 0.0
      %1041 = vmatpush2.msra.mxu0 0.0
      %1042 = vmatprep.subr.mxu0 0.0
      %1043 = vmatpush2.msra.mxu0 0.0
      %1044 = vmatprep.subr.mxu0 0.0
      %1045 = vmatpush2.msra.mxu0 0.0
      %1046 = vmatprep.subr.mxu0 0.0
      %1047 = vmatpush2.msra.mxu0 0.0
      %1048 = vmatprep.subr.mxu0 0.0
      %1049 = vmatpush2.msra.mxu0 0.0
      %1050 = vmatprep.subr.mxu0 0.0
      %1051 = vmatpush2.msra.mxu0 0.0
      %1052 = vmatprep.subr.mxu0 0.0
      %1053 = vmatpush2.msra.mxu0 0.0
      %1054 = vmatprep.subr.mxu0 0.0
      %1055 = vmatpush2.msra.mxu0 0.0
      %1056 = vmatprep.subr.mxu0 0.0
      %1057 = vmatpush2.msra.mxu0 0.0
      %1058 = vmatprep.subr.mxu0 0.0
      %1059 = vmatpush2.msra.mxu0 0.0
      %1060 = vmatprep.subr.mxu0 0.0
      %1061 = vmatpush2.msra.mxu0 0.0
      %1062 = vmatprep.subr.mxu0 0.0
      %1063 = vmatpush2.msra.mxu0 0.0
      %1064 = vmatprep.mubr.f32.mxu0 0.0
      %v1065 = vand.u32 %v759, 4294901760
      %v1066 = vsub.f32 %v759, %v1065
      %v1067 = vand.u32 %v1066, 4294901760
      %1068 = vmatmul.mubr.f32.gmra.mxu0 %v1067
      %v1069 = vpop.f32.mrf.mxu0
      %v1070 = vadd.f32 %v994, %v1069
      %v1071 = vpop.f32.mrf.mxu0
      %v1072 = vadd.f32 %v996, %v1071
      %1073 = vdwg.mxu0
      %1074 = vmatprep.subr.mxu0 0.0
      %1075 = vmatpush1.msra.mxu0 0.0
      %1076 = vmatprep.subr.mxu0 0.0
      %1077 = vmatpush1.msra.mxu0 0.0
      %1078 = vmatprep.subr.mxu0 0.0
      %1079 = vmatpush1.msra.mxu0 0.0
      %1080 = vmatprep.subr.mxu0 0.0
      %1081 = vmatpush1.msra.mxu0 0.0
      %1082 = vmatprep.subr.mxu0 0.0
      %1083 = vmatpush1.msra.mxu0 0.0
      %1084 = vmatprep.subr.mxu0 0.0
      %1085 = vmatpush1.msra.mxu0 0.0
      %1086 = vmatprep.subr.mxu0 0.0
      %1087 = vmatpush1.msra.mxu0 0.0
      %1088 = vmatprep.subr.mxu0 0.0
      %1089 = vmatpush1.msra.mxu0 0.0
      %1090 = vmatprep.subr.mxu0 0.0
      %1091 = vmatpush1.msra.mxu0 0.0
      %1092 = vmatprep.subr.mxu0 0.0
      %1093 = vmatpush1.msra.mxu0 0.0
      %1094 = vmatprep.subr.mxu0 0.0
      %1095 = vmatpush1.msra.mxu0 0.0
      %1096 = vmatprep.subr.mxu0 0.0
      %1097 = vmatpush1.msra.mxu0 0.0
      %1098 = vmatprep.subr.mxu0 0.0
      %1099 = vmatpush1.msra.mxu0 0.0
      %1100 = vmatprep.subr.mxu0 0.0
      %1101 = vmatpush1.msra.mxu0 0.0
      %1102 = vmatprep.subr.mxu0 0.0
      %1103 = vmatpush1.msra.mxu0 0.0
      %v1104 = vand.u32 %v749, 4294901760
      %v1105 = vsub.f32 %v749, %v1104
      %v1106 = vand.u32 %v1105, 4294901760
      %1107 = vmatprep.subr.mxu0 %v1106
      %v1108 = vand.u32 %v748, 4294901760
      %v1109 = vsub.f32 %v748, %v1108
      %v1110 = vand.u32 %v1109, 4294901760
      %1111 = vmatpush1.msra.mxu0 %v1110
      %1112 = vmatprep.subr.mxu0 0.0
      %1113 = vmatpush2.msra.mxu0 0.0
      %1114 = vmatprep.subr.mxu0 0.0
      %1115 = vmatpush2.msra.mxu0 0.0
      %1116 = vmatprep.subr.mxu0 0.0
      %1117 = vmatpush2.msra.mxu0 0.0
      %1118 = vmatprep.subr.mxu0 0.0
      %1119 = vmatpush2.msra.mxu0 0.0
      %1120 = vmatprep.subr.mxu0 0.0
      %1121 = vmatpush2.msra.mxu0 0.0
      %1122 = vmatprep.subr.mxu0 0.0
      %1123 = vmatpush2.msra.mxu0 0.0
      %1124 = vmatprep.subr.mxu0 0.0
      %1125 = vmatpush2.msra.mxu0 0.0
      %1126 = vmatprep.subr.mxu0 0.0
      %1127 = vmatpush2.msra.mxu0 0.0
      %1128 = vmatprep.subr.mxu0 0.0
      %1129 = vmatpush2.msra.mxu0 0.0
      %1130 = vmatprep.subr.mxu0 0.0
      %1131 = vmatpush2.msra.mxu0 0.0
      %1132 = vmatprep.subr.mxu0 0.0
      %1133 = vmatpush2.msra.mxu0 0.0
      %1134 = vmatprep.subr.mxu0 0.0
      %1135 = vmatpush2.msra.mxu0 0.0
      %1136 = vmatprep.subr.mxu0 0.0
      %1137 = vmatpush2.msra.mxu0 0.0
      %1138 = vmatprep.subr.mxu0 0.0
      %1139 = vmatpush2.msra.mxu0 0.0
      %1140 = vmatprep.subr.mxu0 0.0
      %1141 = vmatpush2.msra.mxu0 0.0
      %1142 = vmatprep.subr.mxu0 0.0
      %1143 = vmatpush2.msra.mxu0 0.0
      %1144 = vmatprep.mubr.f32.mxu0 0.0
      %v1145 = vand.u32 %v759, 4294901760
      %1146 = vmatmul.mubr.f32.gmra.mxu0 %v1145
      %v1147 = vpop.f32.mrf.mxu0
      %v1148 = vadd.f32 %v1070, %v1147
      %v1149 = vpop.f32.mrf.mxu0
      %v1150 = vadd.f32 %v1072, %v1149
      %1151 = vdwg.mxu0
      %1152 = vmatprep.subr.mxu0 0.0
      %1153 = vmatpush1.msra.mxu0 0.0
      %1154 = vmatprep.subr.mxu0 0.0
      %1155 = vmatpush1.msra.mxu0 0.0
      %1156 = vmatprep.subr.mxu0 0.0
      %1157 = vmatpush1.msra.mxu0 0.0
      %1158 = vmatprep.subr.mxu0 0.0
      %1159 = vmatpush1.msra.mxu0 0.0
      %1160 = vmatprep.subr.mxu0 0.0
      %1161 = vmatpush1.msra.mxu0 0.0
      %1162 = vmatprep.subr.mxu0 0.0
      %1163 = vmatpush1.msra.mxu0 0.0
      %1164 = vmatprep.subr.mxu0 0.0
      %1165 = vmatpush1.msra.mxu0 0.0
      %1166 = vmatprep.subr.mxu0 0.0
      %1167 = vmatpush1.msra.mxu0 0.0
      %1168 = vmatprep.subr.mxu0 0.0
      %1169 = vmatpush1.msra.mxu0 0.0
      %1170 = vmatprep.subr.mxu0 0.0
      %1171 = vmatpush1.msra.mxu0 0.0
      %1172 = vmatprep.subr.mxu0 0.0
      %1173 = vmatpush1.msra.mxu0 0.0
      %1174 = vmatprep.subr.mxu0 0.0
      %1175 = vmatpush1.msra.mxu0 0.0
      %1176 = vmatprep.subr.mxu0 0.0
      %1177 = vmatpush1.msra.mxu0 0.0
      %1178 = vmatprep.subr.mxu0 0.0
      %1179 = vmatpush1.msra.mxu0 0.0
      %1180 = vmatprep.subr.mxu0 0.0
      %1181 = vmatpush1.msra.mxu0 0.0
      %v1182 = vand.u32 %v749, 4294901760
      %1183 = vmatprep.subr.mxu0 %v1182
      %v1184 = vand.u32 %v748, 4294901760
      %1185 = vmatpush1.msra.mxu0 %v1184
      %1186 = vmatprep.subr.mxu0 0.0
      %1187 = vmatpush2.msra.mxu0 0.0
      %1188 = vmatprep.subr.mxu0 0.0
      %1189 = vmatpush2.msra.mxu0 0.0
      %1190 = vmatprep.subr.mxu0 0.0
      %1191 = vmatpush2.msra.mxu0 0.0
      %1192 = vmatprep.subr.mxu0 0.0
      %1193 = vmatpush2.msra.mxu0 0.0
      %1194 = vmatprep.subr.mxu0 0.0
      %1195 = vmatpush2.msra.mxu0 0.0
      %1196 = vmatprep.subr.mxu0 0.0
      %1197 = vmatpush2.msra.mxu0 0.0
      %1198 = vmatprep.subr.mxu0 0.0
      %1199 = vmatpush2.msra.mxu0 0.0
      %1200 = vmatprep.subr.mxu0 0.0
      %1201 = vmatpush2.msra.mxu0 0.0
      %1202 = vmatprep.subr.mxu0 0.0
      %1203 = vmatpush2.msra.mxu0 0.0
      %1204 = vmatprep.subr.mxu0 0.0
      %1205 = vmatpush2.msra.mxu0 0.0
      %1206 = vmatprep.subr.mxu0 0.0
      %1207 = vmatpush2.msra.mxu0 0.0
      %1208 = vmatprep.subr.mxu0 0.0
      %1209 = vmatpush2.msra.mxu0 0.0
      %1210 = vmatprep.subr.mxu0 0.0
      %1211 = vmatpush2.msra.mxu0 0.0
      %1212 = vmatprep.subr.mxu0 0.0
      %1213 = vmatpush2.msra.mxu0 0.0
      %1214 = vmatprep.subr.mxu0 0.0
      %1215 = vmatpush2.msra.mxu0 0.0
      %1216 = vmatprep.subr.mxu0 0.0
      %1217 = vmatpush2.msra.mxu0 0.0
      %1218 = vmatprep.mubr.f32.mxu0 0.0
      %v1219 = vand.u32 %v759, 4294901760
      %1220 = vmatmul.mubr.f32.gmra.mxu0 %v1219
      %v1221 = vpop.f32.mrf.mxu0
      %v1222 = vadd.f32 %v1148, %v1221
      %v1223 = vpop.f32.mrf.mxu0
      %v1224 = vadd.f32 %v1150, %v1223
      %1225 = vdwg.mxu0
      %v1227 = vadd.f32 %v1222, %v264
      %v1228 = vadd.f32 %v1224, %v273
      %v1231 = vcombine.low %v1227, %v1228
      %1233 = vst [vmem:[%s262] sm:$0xff] %v1231
      %s1234 = smul.u32 2, %s21
      %p1235 = scmp.lt.s32.totalorder %s20, 1
      %s1236 = scalar_select %p1235, %s20, 1
      %p1237 = scmp.lt.s32.totalorder %s1234, 1
      %s1238 = scalar_select %p1237, %s1234, 1
      %s1239 = smul.addr %s1236, 2
      %s1240 = sadd.s32 %s1238, %s1239
      %s1241 = smul.addr %s1240, 4
      %s1242 = scalar_lea.vmem %s5, %s1241
      // Predicated region
      $region41: #{quadpath_forward.1} parent=39 // pred_check
        %p1243 = pneg %p160
      $region42: #{quadpath_forward.1} parent=39 // pred_check_branch
        %1245 = sbr.rel (%p1243) target = $region44
      $region43: #{quadpath_forward.1} parent=39 // pred_region
        %s1246 = smul.u32 2, %s21
      $region44: #{quadpath_forward.1} parent=39 // pred_fallthru
        _
    $region40: #{quadpath_forward.1} parent=5 // pred_fallthru
      _
    %p1247 = scmp.le.s32.totalorder 2, %s11
    // Predicated region
    $region45: #{quadpath_forward.1} parent=5 // pred_check
      %p1248 = pneg %p1247
    $region46: #{quadpath_forward.1} parent=5 // pred_check_branch
      %1250 = sbr.rel (%p1248) target = $region48
    $region47: #{quadpath_forward.1} parent=5 // pred_region
      %s1251 = ssub.s32 %s11, 2
      // Predicated region
      $region49: #{quadpath_forward.1} parent=47 // pred_check
        %p1252 = pneg %p166
      $region50: #{quadpath_forward.1} parent=47 // pred_check_branch
        %1254 = sbr.rel (%p1252) target = $region52
      $region51: #{quadpath_forward.1} parent=47 // pred_region
        %s1255 = smul.u32 2, %s23
        %p1256 = scmp.lt.s32.totalorder %s22, 1
        %s1257 = scalar_select %p1256, %s22, 1
        %p1258 = scmp.lt.s32.totalorder %s1255, 1
        %s1259 = scalar_select %p1258, %s1255, 1
        %s1260 = smul.addr %s1257, 2
        %s1261 = sadd.s32 %s1259, %s1260
        %s1262 = smul.addr %s1261, 4
        %s1263 = scalar_lea.vmem %s5, %s1262
      $region52: #{quadpath_forward.1} parent=47 // pred_fallthru
        _
    $region48: #{quadpath_forward.1} parent=5 // pred_fallthru
      _
  $region6: #{quadpath_forward.1} parent=0 // loop_footer
    %s15 = sadd.s32 1, %s11
  $region7: #{quadpath_forward.1} parent=0 // loop_footer_branch
    %10 = sbr.rel target = $region3
  $region8: #{quadpath_forward.1} parent=0 // loop_exit
    _

</llo_original>
